<compile_context>
chip_gen: v7x
topology: tpu7x:2x2x1
jax: 0.10.0
libtpu: 0.0.40
codegen_flags: <defaults>
</compile_context>

<pallas_src>
import functools

import jax
import jax.numpy as jnp
from jax import lax
from jax.experimental import pallas as pl
from jax.experimental.pallas import tpu as pltpu


def _div_club_bd_kernel(xs_ref, gsum_ref, usq_ref, xsq_ref, *, B, ng, tb):
    """One batch tile: emit per-group sums, sum_b (sum_g xn)^2 per lane, sum ||xn||^2."""
    t = pl.program_id(0)
    D = xs_ref.shape[-1]
    ragged = (B % tb) != 0  # static

    if ragged:
        row = t * tb + lax.broadcasted_iota(jnp.int32, (tb, 1), 0)
        valid = row < B  # (tb, 1)

    u = jnp.zeros((tb, D), jnp.float32)          # sum_g xn[b, g, :]
    xsq = jnp.zeros((1, 1), jnp.float32)         # sum_{b,g} ||xn[b,g,:]||^2
    g_rows = []

    # Static group loop over sublane-dense (tb, D) slices of the VMEM block.
    for g in range(ng):
        x_g = xs_ref[:, g, :].astype(jnp.float32)            # (tb, D)
        if ragged:
            x_g = jnp.where(valid, x_g, 0.0)                  # garbage-safe row mask
        sq = jnp.sum(x_g * x_g, axis=-1, keepdims=True)       # (tb, 1)
        # 1/max(||x||, 1e-12) == rsqrt(max(sq, 1e-24))  (F.normalize eps semantics)
        inv = lax.rsqrt(jnp.maximum(sq, 1e-24))               # (tb, 1), EUP
        xn = x_g * inv                                        # normalized rows
        g_rows.append(jnp.sum(xn, axis=0, keepdims=True))     # (1, D)  = s_g partial
        u = u + xn
        # ||xn_row||^2 == sq * inv * inv exactly (no xn*xn full-tile pass needed).
        xsq = xsq + jnp.sum(sq * inv * inv, axis=0, keepdims=True)

    gsum_ref[...] = jnp.concatenate(g_rows, axis=0)[None]          # (1, ng, D)
    usq_ref[...] = jnp.sum(u * u, axis=0, keepdims=True)[None]     # (1, 1, D)
    xsq_ref[...] = xsq[None]                                       # (1, 1, 1)


def div_club_bd(xs, *, add_global_group=False, pos_pairs='true', batch_tile=1024):
    """xs: (B, K, D) float array (PyTorch layout). Returns scalar float32 loss."""
    B, K, D = xs.shape
    ng = K - 1 if add_global_group else K
    assert ng > 1, 'No. of groups should larger than one'

    # Tile the batch; keep the double-buffered input block well inside scoped VMEM.
    tb = min(B, batch_tile)
    while tb > 8 and 2 * tb * max(K, 8) * max(D, 128) * 4 > (16 << 20):
        tb = max(8, tb // 2)
    nt = pl.cdiv(B, tb)

    kernel = functools.partial(_div_club_bd_kernel, B=B, ng=ng, tb=tb)

    bytes_in = B * K * D * jnp.dtype(xs.dtype).itemsize
    cost = pl.CostEstimate(flops=8 * B * ng * D,
                           transcendentals=B * ng,
                           bytes_accessed=bytes_in + nt * (ng + 2) * D * 4)

    gsum, usq, xsq = pl.pallas_call(
        kernel,
        out_shape=(jax.ShapeDtypeStruct((nt, ng, D), jnp.float32),
                   jax.ShapeDtypeStruct((nt, 1, D), jnp.float32),
                   jax.ShapeDtypeStruct((nt, 1, 1), jnp.float32)),
        grid_spec=pltpu.PrefetchScalarGridSpec(
            num_scalar_prefetch=0,
            grid=(nt,),
            in_specs=[pl.BlockSpec((tb, K, D), lambda t: (t, 0, 0))],
            out_specs=(pl.BlockSpec((1, ng, D), lambda t: (t, 0, 0)),
                       pl.BlockSpec((1, 1, D), lambda t: (t, 0, 0)),
                       pl.BlockSpec((1, 1, 1), lambda t: (t, 0, 0)))),
        compiler_params=pltpu.CompilerParams(
            dimension_semantics=("parallel",),
            vmem_limit_bytes=32 * 1024 * 1024),
        cost_estimate=cost,
    )(xs)

    # Tiny cross-tile reduction + scalar finalize in plain XLA (f32).
    gs = jnp.sum(gsum, axis=0)                                   # (ng, D): s_i
    s_tot = jnp.sum(gs, axis=0)                                  # (D,)
    sum_all_pairs = 0.5 * (jnp.sum(s_tot * s_tot) - jnp.sum(gs * gs))
    tr_pairs = 0.5 * (jnp.sum(usq) - jnp.sum(xsq))
    c_diag = 1.0 / max(1e-5, float(B))                           # C = 1
    c_off = (-1.0 / max(1e-5, float(B * B - B))) if pos_pairs == 'true' else 0.0
    loss = c_off * (sum_all_pairs - tr_pairs) + c_diag * tr_pairs
    return loss / float(ng - 1)


def _reference(xs, *, add_global_group=False, pos_pairs='true'):
    """Pure-JAX reference mirroring the PyTorch module exactly."""
    x = xs / jnp.maximum(jnp.linalg.norm(xs, axis=-1, keepdims=True), 1e-12)
    B, K, _ = xs.shape
    ng = K - 1 if add_global_group else K
    neg = jnp.eye(B, dtype=jnp.float32)
    pos = (jnp.ones((B, B), jnp.float32) - neg) if pos_pairs == 'true' \
        else jnp.zeros((B, B), jnp.float32)
    cons = -1.0 * pos + 1.0 * neg
    nm = pos / jnp.maximum(1e-5, pos.sum()) + neg / jnp.maximum(1e-5, neg.sum())
    loss = 0.0
    for i in range(ng):
        for j in range(i + 1, ng):
            sim = x[:, i, :] @ x[:, j, :].T
            loss = loss + jnp.sum(sim * cons * nm)
    return loss / (ng - 1)


if __name__ == "__main__":
    k1, k2 = jax.random.split(jax.random.PRNGKey(0))

    # Case 1: canonical small shape, single tile.
    B, K, D = 8, 4, 128
    xs = jax.random.normal(k1, (B, K, D), dtype=jnp.float32)
    loss = jax.block_until_ready(div_club_bd(xs, add_global_group=False, pos_pairs='true'))
    ref = _reference(xs, add_global_group=False, pos_pairs='true')
    assert jnp.allclose(loss, ref, atol=1e-5, rtol=1e-4), (loss, ref)

    # Case 2: multi-tile parallel grid with a partial last tile + global group excluded.
    xs2 = jax.random.normal(k2, (10, 5, 128), dtype=jnp.float32)
    loss2 = jax.block_until_ready(
        div_club_bd(xs2, add_global_group=True, pos_pairs='true', batch_tile=4))
    ref2 = _reference(xs2, add_global_group=True, pos_pairs='true')
    assert jnp.allclose(loss2, ref2, atol=1e-5, rtol=1e-4), (loss2, ref2)

    # Case 3: pos_pairs='false' (diagonal-only weighting).
    loss3 = jax.block_until_ready(div_club_bd(xs, pos_pairs='false'))
    ref3 = _reference(xs, pos_pairs='false')
    assert jnp.allclose(loss3, ref3, atol=1e-5, rtol=1e-4), (loss3, ref3)

    # Case 4: bf16 input (compute/accumulation stay f32).
    xsb = xs.astype(jnp.bfloat16)
    loss4 = jax.block_until_ready(div_club_bd(xsb))
    ref4 = _reference(xsb.astype(jnp.float32))
    assert jnp.allclose(loss4, ref4, atol=1e-4, rtol=1e-3), (loss4, ref4)

    print("KERNEL_OK")
</pallas_src>

<mosaic_0001>
module attributes {stable_mosaic.version = 11 : i64} {
  func.func @_div_club_bd_kernel(%arg0: i32, %arg1: memref<8x4x128xf32, #tpu.memory_space<vmem>>, %arg2: memref<1x4x128xf32, #tpu.memory_space<vmem>>, %arg3: memref<1x1x128xf32, #tpu.memory_space<vmem>>, %arg4: memref<1x1x1xf32, #tpu.memory_space<vmem>>) attributes {dimension_semantics = [#tpu.dimension_semantics<parallel>], iteration_bounds = array<i64: 1>, scalar_prefetch = 0 : i64, scratch_operands = 0 : i64, tpu.core_type = #tpu.core_type<tc>, window_params = [{transform_indices = @transform_0, window_bounds = array<i64: 8, 4, 128>}, {transform_indices = @transform_1, window_bounds = array<i64: 1, 4, 128>}, {transform_indices = @transform_2, window_bounds = array<i64: 1, 1, 128>}, {transform_indices = @transform_3, window_bounds = array<i64: 1, 1, 1>}]} {
    %cst = arith.constant 0.000000e+00 : f32
    %0 = vector.broadcast %cst : f32 to vector<8x128xf32>
    %cst_0 = arith.constant 0.000000e+00 : f32
    %1 = vector.broadcast %cst_0 : f32 to vector<1x1xf32>
    %c0 = arith.constant 0 : index
    %c0_1 = arith.constant 0 : index
    %c0_2 = arith.constant 0 : index
    %2 = vector.load %arg1[%c0, %c0_1, %c0_2] : memref<8x4x128xf32, #tpu.memory_space<vmem>>, vector<8x1x128xf32>
    %3 = vector.shape_cast %2 : vector<8x1x128xf32> to vector<8x128xf32>
    %4 = arith.mulf %3, %3 : vector<8x128xf32>
    %cst_3 = arith.constant dense<0.000000e+00> : vector<8xf32>
    %5 = vector.multi_reduction <add>, %4, %cst_3 [1] : vector<8x128xf32> to vector<8xf32>
    %6 = vector.shape_cast %5 : vector<8xf32> to vector<8x1xf32>
    %cst_4 = arith.constant 1.000000e-24 : f32
    %7 = vector.broadcast %cst_4 : f32 to vector<8x1xf32>
    %8 = arith.maximumf %6, %7 : vector<8x1xf32>
    %9 = math.rsqrt %8 : vector<8x1xf32>
    %10 = vector.broadcast %9 : vector<8x1xf32> to vector<8x128xf32>
    %11 = arith.mulf %3, %10 : vector<8x128xf32>
    %cst_5 = arith.constant dense<0.000000e+00> : vector<128xf32>
    %12 = vector.multi_reduction <add>, %11, %cst_5 [0] : vector<8x128xf32> to vector<128xf32>
    %13 = vector.shape_cast %12 : vector<128xf32> to vector<1x128xf32>
    %14 = arith.addf %0, %11 : vector<8x128xf32>
    %15 = arith.mulf %6, %9 : vector<8x1xf32>
    %16 = arith.mulf %15, %9 : vector<8x1xf32>
    %cst_6 = arith.constant dense<0.000000e+00> : vector<1xf32>
    %17 = vector.multi_reduction <add>, %16, %cst_6 [0] : vector<8x1xf32> to vector<1xf32>
    %18 = vector.shape_cast %17 : vector<1xf32> to vector<1x1xf32>
    %19 = arith.addf %1, %18 : vector<1x1xf32>
    %c0_7 = arith.constant 0 : index
    %c1 = arith.constant 1 : index
    %c0_8 = arith.constant 0 : index
    %20 = vector.load %arg1[%c0_7, %c1, %c0_8] : memref<8x4x128xf32, #tpu.memory_space<vmem>>, vector<8x1x128xf32>
    %21 = vector.shape_cast %20 : vector<8x1x128xf32> to vector<8x128xf32>
    %22 = arith.mulf %21, %21 : vector<8x128xf32>
    %cst_9 = arith.constant dense<0.000000e+00> : vector<8xf32>
    %23 = vector.multi_reduction <add>, %22, %cst_9 [1] : vector<8x128xf32> to vector<8xf32>
    %24 = vector.shape_cast %23 : vector<8xf32> to vector<8x1xf32>
    %cst_10 = arith.constant 1.000000e-24 : f32
    %25 = vector.broadcast %cst_10 : f32 to vector<8x1xf32>
    %26 = arith.maximumf %24, %25 : vector<8x1xf32>
    %27 = math.rsqrt %26 : vector<8x1xf32>
    %28 = vector.broadcast %27 : vector<8x1xf32> to vector<8x128xf32>
    %29 = arith.mulf %21, %28 : vector<8x128xf32>
    %cst_11 = arith.constant dense<0.000000e+00> : vector<128xf32>
    %30 = vector.multi_reduction <add>, %29, %cst_11 [0] : vector<8x128xf32> to vector<128xf32>
    %31 = vector.shape_cast %30 : vector<128xf32> to vector<1x128xf32>
    %32 = arith.addf %14, %29 : vector<8x128xf32>
    %33 = arith.mulf %24, %27 : vector<8x1xf32>
    %34 = arith.mulf %33, %27 : vector<8x1xf32>
    %cst_12 = arith.constant dense<0.000000e+00> : vector<1xf32>
    %35 = vector.multi_reduction <add>, %34, %cst_12 [0] : vector<8x1xf32> to vector<1xf32>
    %36 = vector.shape_cast %35 : vector<1xf32> to vector<1x1xf32>
    %37 = arith.addf %19, %36 : vector<1x1xf32>
    %c0_13 = arith.constant 0 : index
    %c2 = arith.constant 2 : index
    %c0_14 = arith.constant 0 : index
    %38 = vector.load %arg1[%c0_13, %c2, %c0_14] : memref<8x4x128xf32, #tpu.memory_space<vmem>>, vector<8x1x128xf32>
    %39 = vector.shape_cast %38 : vector<8x1x128xf32> to vector<8x128xf32>
    %40 = arith.mulf %39, %39 : vector<8x128xf32>
    %cst_15 = arith.constant dense<0.000000e+00> : vector<8xf32>
    %41 = vector.multi_reduction <add>, %40, %cst_15 [1] : vector<8x128xf32> to vector<8xf32>
    %42 = vector.shape_cast %41 : vector<8xf32> to vector<8x1xf32>
    %cst_16 = arith.constant 1.000000e-24 : f32
    %43 = vector.broadcast %cst_16 : f32 to vector<8x1xf32>
    %44 = arith.maximumf %42, %43 : vector<8x1xf32>
    %45 = math.rsqrt %44 : vector<8x1xf32>
    %46 = vector.broadcast %45 : vector<8x1xf32> to vector<8x128xf32>
    %47 = arith.mulf %39, %46 : vector<8x128xf32>
    %cst_17 = arith.constant dense<0.000000e+00> : vector<128xf32>
    %48 = vector.multi_reduction <add>, %47, %cst_17 [0] : vector<8x128xf32> to vector<128xf32>
    %49 = vector.shape_cast %48 : vector<128xf32> to vector<1x128xf32>
    %50 = arith.addf %32, %47 : vector<8x128xf32>
    %51 = arith.mulf %42, %45 : vector<8x1xf32>
    %52 = arith.mulf %51, %45 : vector<8x1xf32>
    %cst_18 = arith.constant dense<0.000000e+00> : vector<1xf32>
    %53 = vector.multi_reduction <add>, %52, %cst_18 [0] : vector<8x1xf32> to vector<1xf32>
    %54 = vector.shape_cast %53 : vector<1xf32> to vector<1x1xf32>
    %55 = arith.addf %37, %54 : vector<1x1xf32>
    %c0_19 = arith.constant 0 : index
    %c3 = arith.constant 3 : index
    %c0_20 = arith.constant 0 : index
    %56 = vector.load %arg1[%c0_19, %c3, %c0_20] : memref<8x4x128xf32, #tpu.memory_space<vmem>>, vector<8x1x128xf32>
    %57 = vector.shape_cast %56 : vector<8x1x128xf32> to vector<8x128xf32>
    %58 = arith.mulf %57, %57 : vector<8x128xf32>
    %cst_21 = arith.constant dense<0.000000e+00> : vector<8xf32>
    %59 = vector.multi_reduction <add>, %58, %cst_21 [1] : vector<8x128xf32> to vector<8xf32>
    %60 = vector.shape_cast %59 : vector<8xf32> to vector<8x1xf32>
    %cst_22 = arith.constant 1.000000e-24 : f32
    %61 = vector.broadcast %cst_22 : f32 to vector<8x1xf32>
    %62 = arith.maximumf %60, %61 : vector<8x1xf32>
    %63 = math.rsqrt %62 : vector<8x1xf32>
    %64 = vector.broadcast %63 : vector<8x1xf32> to vector<8x128xf32>
    %65 = arith.mulf %57, %64 : vector<8x128xf32>
    %cst_23 = arith.constant dense<0.000000e+00> : vector<128xf32>
    %66 = vector.multi_reduction <add>, %65, %cst_23 [0] : vector<8x128xf32> to vector<128xf32>
    %67 = vector.shape_cast %66 : vector<128xf32> to vector<1x128xf32>
    %68 = arith.addf %50, %65 : vector<8x128xf32>
    %69 = arith.mulf %60, %63 : vector<8x1xf32>
    %70 = arith.mulf %69, %63 : vector<8x1xf32>
    %cst_24 = arith.constant dense<0.000000e+00> : vector<1xf32>
    %71 = vector.multi_reduction <add>, %70, %cst_24 [0] : vector<8x1xf32> to vector<1xf32>
    %72 = vector.shape_cast %71 : vector<1xf32> to vector<1x1xf32>
    %73 = arith.addf %55, %72 : vector<1x1xf32>
    %74 = tpu.concatenate %13, %31, %49, %67 in 0 : vector<1x128xf32>, vector<1x128xf32>, vector<1x128xf32>, vector<1x128xf32> -> vector<4x128xf32>
    %75 = vector.shape_cast %74 : vector<4x128xf32> to vector<1x4x128xf32>
    %c0_25 = arith.constant 0 : index
    %c0_26 = arith.constant 0 : index
    %c0_27 = arith.constant 0 : index
    %76 = vector.load %arg2[%c0_25, %c0_26, %c0_27] : memref<1x4x128xf32, #tpu.memory_space<vmem>>, vector<1x4x128xf32>
    tpu.vector_store %arg2[%c0_25, %c0_26, %c0_27], %75 {strides = array<i32>} : memref<1x4x128xf32, #tpu.memory_space<vmem>>, vector<1x4x128xf32>,
    %77 = arith.mulf %68, %68 : vector<8x128xf32>
    %cst_28 = arith.constant dense<0.000000e+00> : vector<128xf32>
    %78 = vector.multi_reduction <add>, %77, %cst_28 [0] : vector<8x128xf32> to vector<128xf32>
    %79 = vector.shape_cast %78 : vector<128xf32> to vector<1x128xf32>
    %80 = vector.shape_cast %79 : vector<1x128xf32> to vector<1x1x128xf32>
    %c0_29 = arith.constant 0 : index
    %c0_30 = arith.constant 0 : index
    %c0_31 = arith.constant 0 : index
    %81 = vector.load %arg3[%c0_29, %c0_30, %c0_31] : memref<1x1x128xf32, #tpu.memory_space<vmem>>, vector<1x1x128xf32>
    tpu.vector_store %arg3[%c0_29, %c0_30, %c0_31], %80 {strides = array<i32>} : memref<1x1x128xf32, #tpu.memory_space<vmem>>, vector<1x1x128xf32>,
    %82 = vector.shape_cast %73 : vector<1x1xf32> to vector<1x1x1xf32>
    %c0_32 = arith.constant 0 : index
    %c0_33 = arith.constant 0 : index
    %c0_34 = arith.constant 0 : index
    %83 = vector.load %arg4[%c0_32, %c0_33, %c0_34] : memref<1x1x1xf32, #tpu.memory_space<vmem>>, vector<1x1x1xf32>
    tpu.vector_store %arg4[%c0_32, %c0_33, %c0_34], %82 {strides = array<i32>} : memref<1x1x1xf32, #tpu.memory_space<vmem>>, vector<1x1x1xf32>,
    return
  }
  func.func @transform_0(%arg0: i32) -> (i32, i32, i32) {
    %c0_i32 = arith.constant 0 : i32
    %c0_i32_0 = arith.constant 0 : i32
    %c0_i32_1 = arith.constant 0 : i32
    return %arg0, %c0_i32, %c0_i32_0 : i32, i32, i32
  }
  func.func @transform_1(%arg0: i32) -> (i32, i32, i32) {
    %c0_i32 = arith.constant 0 : i32
    %c0_i32_0 = arith.constant 0 : i32
    %c0_i32_1 = arith.constant 0 : i32
    return %arg0, %c0_i32, %c0_i32_0 : i32, i32, i32
  }
  func.func @transform_2(%arg0: i32) -> (i32, i32, i32) {
    %c0_i32 = arith.constant 0 : i32
    %c0_i32_0 = arith.constant 0 : i32
    %c0_i32_1 = arith.constant 0 : i32
    return %arg0, %c0_i32, %c0_i32_0 : i32, i32, i32
  }
  func.func @transform_3(%arg0: i32) -> (i32, i32, i32) {
    %c0_i32 = arith.constant 0 : i32
    %c0_i32_0 = arith.constant 0 : i32
    %c0_i32_1 = arith.constant 0 : i32
    return %arg0, %c0_i32, %c0_i32_0 : i32, i32, i32
  }
}

</mosaic_0001>

<llo_original>
// kernel: tpu_custom_call.1
$region0: #{tpu_custom_call.1}
  #allocation0 [shape = 'u32[]', space=smem, size = 0x4, offset = 0x4, fixed_abs, tag = 'smem constant byte address 0x4 - core index']
  #allocation1 [shape = 'u32[144,128]{1,0:T(1,128)}', space=vmem, size = 0x12000, scoped, tag = 'internal scratch']
  %s0 = inlined_call_operand.hbm [shape: f32[8,4,128], index: 0, kind: input, shape index: {}]
  %s1 = inlined_call_operand.hbm [shape: f32[1,4,128], index: 1, kind: output, shape index: {0}]
  %s2 = inlined_call_operand.hbm [shape: f32[1,1,128], index: 2, kind: output, shape index: {1}]
  %s3 = inlined_call_operand.hbm [shape: f32[1,1,1], index: 3, kind: output, shape index: {2}]
  %4 = xla_tuple %s1, %s2, %s3
  %s5 = sld [smem:[#allocation0]]
  $region34: #{tpu_custom_call.1} parent=0
    _
  %s7 = ssub.s32 1, %s5
  %s8 = scalar_select 0, %s7, %s5
  $region1: #{tpu_custom_call.1} parent=0
    #allocation2 [shape = 'u8[16384]{0}', space=vmem, size = 0x4000, scoped, tag = 'input window, operand 0, single buffered']
    #allocation3 [shape = 's32[1]{0}', space=sflag, size = 0x4, scoped, tag = 'scoped memory for tpu_custom_call.1']
    #allocation4 [shape = 's32[1]{0}', space=sflag, size = 0x4, scoped, tag = 'scoped memory for tpu_custom_call.1']
    #allocation5 [shape = 'u8[2048]{0}', space=vmem, size = 0x800, scoped, tag = 'output window, operand 0, single buffered']
    #allocation6 [shape = 'u8[512]{0}', space=vmem, size = 0x400, scoped, tag = 'output window, operand 1, single buffered']
    #allocation7 [shape = 's32[1]{0}', space=sflag, size = 0x4, scoped, tag = 'scoped memory for tpu_custom_call.1']
    #allocation8 [shape = 'u8[512]{0}', space=vmem, size = 0x400, scoped, tag = 'output window, operand 2, single buffered']
    %9 = vsyncpa [#allocation3], 0
    %10 = vsyncpa [#allocation4], 0
    %11 = vsyncpa [#allocation7], 0
    // Predicated region
    $region2: #{tpu_custom_call.1} parent=1 // pred_check
      _
    $region3: #{tpu_custom_call.1} parent=1 // pred_check_branch
      %13 = sbr.rel (0) target = $region5
    $region4: #{tpu_custom_call.1} parent=1 // pred_region
      %s15 = ssub.s32 512, 512
      %16 = vsyncadd [#allocation3], %s15
      %s17 = sshll.u32 [#allocation2], 4
      %s18 = int_to_ptr.vmem [resolvable:$true] %s17
      %23 = dma.hbm_to_vmem [thread:$0]  %s0, 512, %s18, [#allocation3], 64, 64, 4
    $region5: #{tpu_custom_call.1} parent=1 // pred_fallthru
      _
    // Predicated region
    $region6: #{tpu_custom_call.1} parent=1 // pred_check
      _
    $region7: #{tpu_custom_call.1} parent=1 // pred_check_branch
      %25 = sbr.rel (0) target = $region9
    $region8: #{tpu_custom_call.1} parent=1 // pred_region
      %26 = dma.done [#allocation3], 512
    $region9: #{tpu_custom_call.1} parent=1 // pred_fallthru
      _
    %v27 = vld [vmem:[#allocation2] sm:$0x1]
    %v28 = vld [vmem:[#allocation2 + $0x4] sm:$0x1]
    %v29 = vld [vmem:[#allocation2 + $0x8] sm:$0x1]
    %v30 = vld [vmem:[#allocation2 + $0xc] sm:$0x1]
    %v31 = vld [vmem:[#allocation2 + $0x10] sm:$0x1]
    %v32 = vld [vmem:[#allocation2 + $0x14] sm:$0x1]
    %v33 = vld [vmem:[#allocation2 + $0x18] sm:$0x1]
    %v34 = vld [vmem:[#allocation2 + $0x1c] sm:$0x1]
    %v35 = vmul.f32 %v27, %v27
    %v36 = vmul.f32 %v28, %v28
    %v37 = vmul.f32 %v29, %v29
    %v38 = vmul.f32 %v30, %v30
    %v39 = vmul.f32 %v31, %v31
    %v40 = vmul.f32 %v32, %v32
    %v41 = vmul.f32 %v33, %v33
    %v42 = vmul.f32 %v34, %v34
    %v51 = vrot.slane %v36, 7
    %vm52 = vcmask 1041409
    %v53 = vsel %vm52, %v51, %v35
    %v54 = vrot.slane %v37, 6
    %vm55 = vcmask 1042434
    %v56 = vsel %vm55, %v54, %v53
    %v57 = vrot.slane %v38, 5
    %vm58 = vcmask 1043459
    %v59 = vsel %vm58, %v57, %v56
    %v60 = vrot.slane %v39, 4
    %vm61 = vcmask 1044484
    %v62 = vsel %vm61, %v60, %v59
    %v63 = vrot.slane %v40, 3
    %vm64 = vcmask 1045509
    %v65 = vsel %vm64, %v63, %v62
    %v66 = vrot.slane %v41, 2
    %vm67 = vcmask 1046534
    %v68 = vsel %vm67, %v66, %v65
    %v69 = vrot.slane %v42, 1
    %vm70 = vcmask 1047559
    %v71 = vsel %vm70, %v69, %v68
    %73 = vadd.xlane.f32.xlu0 %v71
    %v74 = vpop.xlane.xlu0 %73
    %v75 = vmax.f32 %v74, 1e-24
    %v76 = vrsqrt.pop %v75
    %v78 = vrot.slane %v76, 1
    %v79 = vrot.slane %v76, 2
    %v80 = vrot.slane %v76, 3
    %v81 = vrot.slane %v76, 4
    %v82 = vrot.slane %v76, 5
    %v83 = vrot.slane %v76, 6
    %v84 = vrot.slane %v76, 7
    %v93 = vmul.f32 %v27, %v76
    %v94 = vmul.f32 %v28, %v78
    %v95 = vmul.f32 %v29, %v79
    %v96 = vmul.f32 %v30, %v80
    %v97 = vmul.f32 %v31, %v81
    %v98 = vmul.f32 %v32, %v82
    %v99 = vmul.f32 %v33, %v83
    %v100 = vmul.f32 %v34, %v84
    %v109 = vrot.slane %v94, 7
    %v110 = vsel %vm52, %v109, %v93
    %v111 = vrot.slane %v95, 6
    %v112 = vsel %vm55, %v111, %v110
    %v113 = vrot.slane %v96, 5
    %v114 = vsel %vm58, %v113, %v112
    %v115 = vrot.slane %v97, 4
    %v116 = vsel %vm61, %v115, %v114
    %v117 = vrot.slane %v98, 3
    %v118 = vsel %vm64, %v117, %v116
    %v119 = vrot.slane %v99, 2
    %v120 = vsel %vm67, %v119, %v118
    %v121 = vrot.slane %v100, 1
    %v122 = vsel %vm70, %v121, %v120
    %v124 = vrot.slane %v122, 4
    %v125 = vadd.f32 %v122, %v124
    %v126 = vrot.slane %v125, 2
    %v127 = vadd.f32 %v125, %v126
    %v128 = vrot.slane %v127, 1
    %v129 = vadd.f32 %v127, %v128
    %v130 = vadd.f32 %v93, 0.0
    %v131 = vadd.f32 %v94, 0.0
    %v132 = vadd.f32 %v95, 0.0
    %v133 = vadd.f32 %v96, 0.0
    %v134 = vadd.f32 %v97, 0.0
    %v135 = vadd.f32 %v98, 0.0
    %v136 = vadd.f32 %v99, 0.0
    %v137 = vadd.f32 %v100, 0.0
    %v138 = vmul.f32 %v74, %v76
    %v139 = vmul.f32 %v138, %v76
    %v140 = vrot.slane %v139, 4
    %v141 = vadd.f32 %v139, %v140
    %v142 = vrot.slane %v141, 2
    %v143 = vadd.f32 %v141, %v142
    %v144 = vrot.slane %v143, 1
    %v145 = vadd.f32 %v143, %v144
    %v146 = vadd.f32 %v145, 0.0
    %v147 = vld [vmem:[#allocation2 + $0x1] sm:$0x1]
    %v148 = vld [vmem:[#allocation2 + $0x5] sm:$0x1]
    %v149 = vld [vmem:[#allocation2 + $0x9] sm:$0x1]
    %v150 = vld [vmem:[#allocation2 + $0xd] sm:$0x1]
    %v151 = vld [vmem:[#allocation2 + $0x11] sm:$0x1]
    %v152 = vld [vmem:[#allocation2 + $0x15] sm:$0x1]
    %v153 = vld [vmem:[#allocation2 + $0x19] sm:$0x1]
    %v154 = vld [vmem:[#allocation2 + $0x1d] sm:$0x1]
    %v155 = vmul.f32 %v147, %v147
    %v156 = vmul.f32 %v148, %v148
    %v157 = vmul.f32 %v149, %v149
    %v158 = vmul.f32 %v150, %v150
    %v159 = vmul.f32 %v151, %v151
    %v160 = vmul.f32 %v152, %v152
    %v161 = vmul.f32 %v153, %v153
    %v162 = vmul.f32 %v154, %v154
    %v171 = vrot.slane %v156, 7
    %v172 = vsel %vm52, %v171, %v155
    %v173 = vrot.slane %v157, 6
    %v174 = vsel %vm55, %v173, %v172
    %v175 = vrot.slane %v158, 5
    %v176 = vsel %vm58, %v175, %v174
    %v177 = vrot.slane %v159, 4
    %v178 = vsel %vm61, %v177, %v176
    %v179 = vrot.slane %v160, 3
    %v180 = vsel %vm64, %v179, %v178
    %v181 = vrot.slane %v161, 2
    %v182 = vsel %vm67, %v181, %v180
    %v183 = vrot.slane %v162, 1
    %v184 = vsel %vm70, %v183, %v182
    %186 = vadd.xlane.f32.xlu0 %v184
    %v187 = vpop.xlane.xlu0 %186
    %v188 = vmax.f32 %v187, 1e-24
    %v189 = vrsqrt.pop %v188
    %v191 = vrot.slane %v189, 1
    %v192 = vrot.slane %v189, 2
    %v193 = vrot.slane %v189, 3
    %v194 = vrot.slane %v189, 4
    %v195 = vrot.slane %v189, 5
    %v196 = vrot.slane %v189, 6
    %v197 = vrot.slane %v189, 7
    %v206 = vmul.f32 %v147, %v189
    %v207 = vmul.f32 %v148, %v191
    %v208 = vmul.f32 %v149, %v192
    %v209 = vmul.f32 %v150, %v193
    %v210 = vmul.f32 %v151, %v194
    %v211 = vmul.f32 %v152, %v195
    %v212 = vmul.f32 %v153, %v196
    %v213 = vmul.f32 %v154, %v197
    %v222 = vrot.slane %v207, 7
    %v223 = vsel %vm52, %v222, %v206
    %v224 = vrot.slane %v208, 6
    %v225 = vsel %vm55, %v224, %v223
    %v226 = vrot.slane %v209, 5
    %v227 = vsel %vm58, %v226, %v225
    %v228 = vrot.slane %v210, 4
    %v229 = vsel %vm61, %v228, %v227
    %v230 = vrot.slane %v211, 3
    %v231 = vsel %vm64, %v230, %v229
    %v232 = vrot.slane %v212, 2
    %v233 = vsel %vm67, %v232, %v231
    %v234 = vrot.slane %v213, 1
    %v235 = vsel %vm70, %v234, %v233
    %v237 = vrot.slane %v235, 4
    %v238 = vadd.f32 %v235, %v237
    %v239 = vrot.slane %v238, 2
    %v240 = vadd.f32 %v238, %v239
    %v241 = vrot.slane %v240, 1
    %v242 = vadd.f32 %v240, %v241
    %v243 = vadd.f32 %v130, %v206
    %v244 = vadd.f32 %v131, %v207
    %v245 = vadd.f32 %v132, %v208
    %v246 = vadd.f32 %v133, %v209
    %v247 = vadd.f32 %v134, %v210
    %v248 = vadd.f32 %v135, %v211
    %v249 = vadd.f32 %v136, %v212
    %v250 = vadd.f32 %v137, %v213
    %v251 = vmul.f32 %v187, %v189
    %v252 = vmul.f32 %v251, %v189
    %v253 = vrot.slane %v252, 4
    %v254 = vadd.f32 %v252, %v253
    %v255 = vrot.slane %v254, 2
    %v256 = vadd.f32 %v254, %v255
    %v257 = vrot.slane %v256, 1
    %v258 = vadd.f32 %v256, %v257
    %v259 = vadd.f32 %v146, %v258
    %v260 = vld [vmem:[#allocation2 + $0x2] sm:$0x1]
    %v261 = vld [vmem:[#allocation2 + $0x6] sm:$0x1]
    %v262 = vld [vmem:[#allocation2 + $0xa] sm:$0x1]
    %v263 = vld [vmem:[#allocation2 + $0xe] sm:$0x1]
    %v264 = vld [vmem:[#allocation2 + $0x12] sm:$0x1]
    %v265 = vld [vmem:[#allocation2 + $0x16] sm:$0x1]
    %v266 = vld [vmem:[#allocation2 + $0x1a] sm:$0x1]
    %v267 = vld [vmem:[#allocation2 + $0x1e] sm:$0x1]
    %v268 = vmul.f32 %v260, %v260
    %v269 = vmul.f32 %v261, %v261
    %v270 = vmul.f32 %v262, %v262
    %v271 = vmul.f32 %v263, %v263
    %v272 = vmul.f32 %v264, %v264
    %v273 = vmul.f32 %v265, %v265
    %v274 = vmul.f32 %v266, %v266
    %v275 = vmul.f32 %v267, %v267
    %v284 = vrot.slane %v269, 7
    %v285 = vsel %vm52, %v284, %v268
    %v286 = vrot.slane %v270, 6
    %v287 = vsel %vm55, %v286, %v285
    %v288 = vrot.slane %v271, 5
    %v289 = vsel %vm58, %v288, %v287
    %v290 = vrot.slane %v272, 4
    %v291 = vsel %vm61, %v290, %v289
    %v292 = vrot.slane %v273, 3
    %v293 = vsel %vm64, %v292, %v291
    %v294 = vrot.slane %v274, 2
    %v295 = vsel %vm67, %v294, %v293
    %v296 = vrot.slane %v275, 1
    %v297 = vsel %vm70, %v296, %v295
    %299 = vadd.xlane.f32.xlu0 %v297
    %v300 = vpop.xlane.xlu0 %299
    %v301 = vmax.f32 %v300, 1e-24
    %v302 = vrsqrt.pop %v301
    %v304 = vrot.slane %v302, 1
    %v305 = vrot.slane %v302, 2
    %v306 = vrot.slane %v302, 3
    %v307 = vrot.slane %v302, 4
    %v308 = vrot.slane %v302, 5
    %v309 = vrot.slane %v302, 6
    %v310 = vrot.slane %v302, 7
    %v319 = vmul.f32 %v260, %v302
    %v320 = vmul.f32 %v261, %v304
    %v321 = vmul.f32 %v262, %v305
    %v322 = vmul.f32 %v263, %v306
    %v323 = vmul.f32 %v264, %v307
    %v324 = vmul.f32 %v265, %v308
    %v325 = vmul.f32 %v266, %v309
    %v326 = vmul.f32 %v267, %v310
    %v335 = vrot.slane %v320, 7
    %v336 = vsel %vm52, %v335, %v319
    %v337 = vrot.slane %v321, 6
    %v338 = vsel %vm55, %v337, %v336
    %v339 = vrot.slane %v322, 5
    %v340 = vsel %vm58, %v339, %v338
    %v341 = vrot.slane %v323, 4
    %v342 = vsel %vm61, %v341, %v340
    %v343 = vrot.slane %v324, 3
    %v344 = vsel %vm64, %v343, %v342
    %v345 = vrot.slane %v325, 2
    %v346 = vsel %vm67, %v345, %v344
    %v347 = vrot.slane %v326, 1
    %v348 = vsel %vm70, %v347, %v346
    %v350 = vrot.slane %v348, 4
    %v351 = vadd.f32 %v348, %v350
    %v352 = vrot.slane %v351, 2
    %v353 = vadd.f32 %v351, %v352
    %v354 = vrot.slane %v353, 1
    %v355 = vadd.f32 %v353, %v354
    %v356 = vadd.f32 %v243, %v319
    %v357 = vadd.f32 %v244, %v320
    %v358 = vadd.f32 %v245, %v321
    %v359 = vadd.f32 %v246, %v322
    %v360 = vadd.f32 %v247, %v323
    %v361 = vadd.f32 %v248, %v324
    %v362 = vadd.f32 %v249, %v325
    %v363 = vadd.f32 %v250, %v326
    %v364 = vmul.f32 %v300, %v302
    %v365 = vmul.f32 %v364, %v302
    %v366 = vrot.slane %v365, 4
    %v367 = vadd.f32 %v365, %v366
    %v368 = vrot.slane %v367, 2
    %v369 = vadd.f32 %v367, %v368
    %v370 = vrot.slane %v369, 1
    %v371 = vadd.f32 %v369, %v370
    %v372 = vadd.f32 %v259, %v371
    %v373 = vld [vmem:[#allocation2 + $0x3] sm:$0x1]
    %v374 = vld [vmem:[#allocation2 + $0x7] sm:$0x1]
    %v375 = vld [vmem:[#allocation2 + $0xb] sm:$0x1]
    %v376 = vld [vmem:[#allocation2 + $0xf] sm:$0x1]
    %v377 = vld [vmem:[#allocation2 + $0x13] sm:$0x1]
    %v378 = vld [vmem:[#allocation2 + $0x17] sm:$0x1]
    %v379 = vld [vmem:[#allocation2 + $0x1b] sm:$0x1]
    %v380 = vld [vmem:[#allocation2 + $0x1f] sm:$0x1]
    %v381 = vmul.f32 %v373, %v373
    %v382 = vmul.f32 %v374, %v374
    %v383 = vmul.f32 %v375, %v375
    %v384 = vmul.f32 %v376, %v376
    %v385 = vmul.f32 %v377, %v377
    %v386 = vmul.f32 %v378, %v378
    %v387 = vmul.f32 %v379, %v379
    %v388 = vmul.f32 %v380, %v380
    %v397 = vrot.slane %v382, 7
    %v398 = vsel %vm52, %v397, %v381
    %v399 = vrot.slane %v383, 6
    %v400 = vsel %vm55, %v399, %v398
    %v401 = vrot.slane %v384, 5
    %v402 = vsel %vm58, %v401, %v400
    %v403 = vrot.slane %v385, 4
    %v404 = vsel %vm61, %v403, %v402
    %v405 = vrot.slane %v386, 3
    %v406 = vsel %vm64, %v405, %v404
    %v407 = vrot.slane %v387, 2
    %v408 = vsel %vm67, %v407, %v406
    %v409 = vrot.slane %v388, 1
    %v410 = vsel %vm70, %v409, %v408
    %412 = vadd.xlane.f32.xlu0 %v410
    %v413 = vpop.xlane.xlu0 %412
    %v414 = vmax.f32 %v413, 1e-24
    %v415 = vrsqrt.pop %v414
    %v417 = vrot.slane %v415, 1
    %v418 = vrot.slane %v415, 2
    %v419 = vrot.slane %v415, 3
    %v420 = vrot.slane %v415, 4
    %v421 = vrot.slane %v415, 5
    %v422 = vrot.slane %v415, 6
    %v423 = vrot.slane %v415, 7
    %v432 = vmul.f32 %v373, %v415
    %v433 = vmul.f32 %v374, %v417
    %v434 = vmul.f32 %v375, %v418
    %v435 = vmul.f32 %v376, %v419
    %v436 = vmul.f32 %v377, %v420
    %v437 = vmul.f32 %v378, %v421
    %v438 = vmul.f32 %v379, %v422
    %v439 = vmul.f32 %v380, %v423
    %v448 = vrot.slane %v433, 7
    %v449 = vsel %vm52, %v448, %v432
    %v450 = vrot.slane %v434, 6
    %v451 = vsel %vm55, %v450, %v449
    %v452 = vrot.slane %v435, 5
    %v453 = vsel %vm58, %v452, %v451
    %v454 = vrot.slane %v436, 4
    %v455 = vsel %vm61, %v454, %v453
    %v456 = vrot.slane %v437, 3
    %v457 = vsel %vm64, %v456, %v455
    %v458 = vrot.slane %v438, 2
    %v459 = vsel %vm67, %v458, %v457
    %v460 = vrot.slane %v439, 1
    %v461 = vsel %vm70, %v460, %v459
    %v463 = vrot.slane %v461, 4
    %v464 = vadd.f32 %v461, %v463
    %v465 = vrot.slane %v464, 2
    %v466 = vadd.f32 %v464, %v465
    %v467 = vrot.slane %v466, 1
    %v468 = vadd.f32 %v466, %v467
    %v469 = vadd.f32 %v356, %v432
    %v470 = vadd.f32 %v357, %v433
    %v471 = vadd.f32 %v358, %v434
    %v472 = vadd.f32 %v359, %v435
    %v473 = vadd.f32 %v360, %v436
    %v474 = vadd.f32 %v361, %v437
    %v475 = vadd.f32 %v362, %v438
    %v476 = vadd.f32 %v363, %v439
    %v477 = vmul.f32 %v413, %v415
    %v478 = vmul.f32 %v477, %v415
    %v479 = vrot.slane %v478, 4
    %v480 = vadd.f32 %v478, %v479
    %v481 = vrot.slane %v480, 2
    %v482 = vadd.f32 %v480, %v481
    %v483 = vrot.slane %v482, 1
    %v484 = vadd.f32 %v482, %v483
    %v485 = vadd.f32 %v372, %v484
    %v487 = vrot.slane %v242, 7
    %v490 = vrot.slane %v355, 6
    %v493 = vrot.slane %v468, 5
    %vm495 = vcmask 1040384
    %v496 = vsel %vm495, %v129, %v487
    %vm497 = vcmask 1041408
    %v498 = vsel %vm497, %v496, %v490
    %vm499 = vcmask 1042432
    %v500 = vsel %vm499, %v498, %v493
    %501 = vst [vmem:[#allocation5] sm:$0xf] %v500
    %v502 = vmul.f32 %v469, %v469
    %v503 = vmul.f32 %v470, %v470
    %v504 = vmul.f32 %v471, %v471
    %v505 = vmul.f32 %v472, %v472
    %v506 = vmul.f32 %v473, %v473
    %v507 = vmul.f32 %v474, %v474
    %v508 = vmul.f32 %v475, %v475
    %v509 = vmul.f32 %v476, %v476
    %v518 = vrot.slane %v503, 7
    %v519 = vsel %vm52, %v518, %v502
    %v520 = vrot.slane %v504, 6
    %v521 = vsel %vm55, %v520, %v519
    %v522 = vrot.slane %v505, 5
    %v523 = vsel %vm58, %v522, %v521
    %v524 = vrot.slane %v506, 4
    %v525 = vsel %vm61, %v524, %v523
    %v526 = vrot.slane %v507, 3
    %v527 = vsel %vm64, %v526, %v525
    %v528 = vrot.slane %v508, 2
    %v529 = vsel %vm67, %v528, %v527
    %v530 = vrot.slane %v509, 1
    %v531 = vsel %vm70, %v530, %v529
    %v533 = vrot.slane %v531, 4
    %v534 = vadd.f32 %v531, %v533
    %v535 = vrot.slane %v534, 2
    %v536 = vadd.f32 %v534, %v535
    %v537 = vrot.slane %v536, 1
    %v538 = vadd.f32 %v536, %v537
    %539 = vst [vmem:[#allocation6] sm:$0x1] %v538
    %vm540 = vcmask 0
    %541 = vst.msk [vmem:[#allocation8] sm:$0x1] %vm540, %v485
    // Predicated region
    $region10: #{tpu_custom_call.1} parent=1 // pred_check
      _
    $region11: #{tpu_custom_call.1} parent=1 // pred_check_branch
      %543 = sbr.rel (0) target = $region13
    $region12: #{tpu_custom_call.1} parent=1 // pred_region
      %s545 = ssub.s32 64, 64
      %546 = vsyncadd [#allocation4], %s545
      %s548 = sshll.u32 [#allocation5], 4
      %s549 = int_to_ptr.vmem [resolvable:$true] %s548
      %551 = dma.vmem_to_hbm [thread:$0]  %s549, 64, %s1, [#allocation4]
    $region13: #{tpu_custom_call.1} parent=1 // pred_fallthru
      _
    // Predicated region
    $region14: #{tpu_custom_call.1} parent=1 // pred_check
      _
    $region15: #{tpu_custom_call.1} parent=1 // pred_check_branch
      %553 = sbr.rel (0) target = $region17
    $region16: #{tpu_custom_call.1} parent=1 // pred_region
      %s555 = ssub.s32 16, 16
      %556 = vsyncadd [#allocation7], %s555
      %s558 = sshll.u32 [#allocation6], 4
      %s559 = int_to_ptr.vmem [resolvable:$true] %s558
      %561 = dma.vmem_to_hbm [thread:$0]  %s559, 16, %s2, [#allocation7]
    $region17: #{tpu_custom_call.1} parent=1 // pred_fallthru
      _
    // Predicated region
    $region18: #{tpu_custom_call.1} parent=1 // pred_check
      _
    $region19: #{tpu_custom_call.1} parent=1 // pred_check_branch
      %563 = sbr.rel (0) target = $region21
    $region20: #{tpu_custom_call.1} parent=1 // pred_region
      %s565 = ssub.s32 16, 16
      %566 = vsyncadd [#allocation7], %s565
      %s568 = sshll.u32 [#allocation8], 4
      %s569 = int_to_ptr.vmem [resolvable:$true] %s568
      %571 = dma.vmem_to_hbm [thread:$0]  %s569, 16, %s3, [#allocation7]
    $region21: #{tpu_custom_call.1} parent=1 // pred_fallthru
      _
    // Predicated region
    $region22: #{tpu_custom_call.1} parent=1 // pred_check
      _
    $region23: #{tpu_custom_call.1} parent=1 // pred_check_branch
      %573 = sbr.rel (0) target = $region25
    $region24: #{tpu_custom_call.1} parent=1 // pred_region
      %574 = dma.done [#allocation4], 64
    $region25: #{tpu_custom_call.1} parent=1 // pred_fallthru
      _
    // Predicated region
    $region26: #{tpu_custom_call.1} parent=1 // pred_check
      _
    $region27: #{tpu_custom_call.1} parent=1 // pred_check_branch
      %576 = sbr.rel (0) target = $region29
    $region28: #{tpu_custom_call.1} parent=1 // pred_region
      %577 = dma.done [#allocation7], 16
    $region29: #{tpu_custom_call.1} parent=1 // pred_fallthru
      _
    // Predicated region
    $region30: #{tpu_custom_call.1} parent=1 // pred_check
      _
    $region31: #{tpu_custom_call.1} parent=1 // pred_check_branch
      %579 = sbr.rel (0) target = $region33
    $region32: #{tpu_custom_call.1} parent=1 // pred_region
      %580 = dma.done [#allocation7], 16
    $region33: #{tpu_custom_call.1} parent=1 // pred_fallthru
      _
    %581 = vsyncpa [#allocation3], 1
    %582 = vsyncpa [#allocation4], 1
    %583 = vsyncpa [#allocation7], 1

</llo_original>
